<compile_context>
chip_gen: v6e
topology: v6e:2x2x1
jax: 0.10.0
libtpu: 0.0.40
codegen_flags: <defaults>
</compile_context>

<pallas_src>
import jax
import jax.numpy as jnp
from jax.experimental import pallas as pl
from jax.experimental.pallas import tpu as pltpu

_MiB = 1024 * 1024


def cls_head_kernel(x_ref, wt_ref, b_ref, o_ref):
    # x_ref : (tm, D)  row tile of the flattened input (D on lanes -> dense load)
    # wt_ref: (N, D)   pre-transposed weight, resident across the grid
    # b_ref : (N, 1)   bias column
    # o_ref : (N, tm)  transposed output tile (tm on lanes -> dense store)
    acc_t = jax.lax.dot_general(
        wt_ref[...], x_ref[...],
        dimension_numbers=(((1,), (1,)), ((), ())),   # contract over D -> (N, tm)
        preferred_element_type=jnp.float32,
    )
    acc_t = acc_t + b_ref[...].astype(jnp.float32)    # broadcast bias over rows
    o_ref[...] = acc_t.astype(o_ref.dtype)


def _round_up(a, m):
    return (a + m - 1) // m * m


def _padded_vmem_bytes(shape, dtype):
    """Bytes one VMEM buffer of `shape` occupies after TPU tiling padding
    (last dim -> multiple of 128 lanes, second-to-last -> 8/16/32 sublanes)."""
    dt = jnp.dtype(dtype)
    sublane = {4: 8, 2: 16, 1: 32}.get(dt.itemsize, 8)
    last = _round_up(int(shape[-1]), 128)
    second = _round_up(int(shape[-2]), sublane) if len(shape) >= 2 else 1
    lead = 1
    for d in shape[:-2]:
        lead *= int(d)
    return lead * second * last * dt.itemsize


def _vmem_budget():
    """Generation-aware (working-set budget, scoped-limit cap, min grid steps)."""
    try:
        cap = int(pltpu.get_tpu_info().vmem_capacity_bytes)
    except Exception:
        cap = 64 * _MiB                       # conservative: v7x per-TC VMEM
    if cap >= 100 * _MiB:                     # v5e / v6e: 128 MiB VMEM
        return 80 * _MiB, 96 * _MiB, 2
    # v7x: 64 MiB per TensorCore; leave compiler scratch headroom and make sure
    # both TCs get >= 2 pipelined steps each under ("parallel",) sharding.
    return 30 * _MiB, 40 * _MiB, 4


def _pick_row_tile(M, D, N, x_dtype, w_dtype, b_dtype, out_dtype, budget, min_steps):
    """Largest lane-dense row tile whose padded, double-buffered working set
    (x tile + out tile + resident Wt + bias) fits the generation budget."""
    fixed = (2 * _padded_vmem_bytes((N, D), w_dtype)
             + _padded_vmem_bytes((N, 1), b_dtype))

    def tile_bytes(tm):
        return (2 * _padded_vmem_bytes((tm, D), x_dtype)
                + 2 * _padded_vmem_bytes((N, tm), out_dtype))

    tm = 128
    for cand in (2048, 1024, 512, 256, 128):
        if fixed + tile_bytes(cand) <= budget:
            tm = cand
            break
    # Keep enough grid steps for software pipelining (and, on v7x, for both
    # TensorCores); never go below the 128-lane-dense minimum.
    while tm > 128 and pl.cdiv(M, tm) < min_steps:
        tm //= 2
    return tm, fixed + tile_bytes(tm)


def classification_head(x, W, b):
    """x: [batch, pos, d_model] -> [batch, pos, num_labels]  (== b + x @ W)."""
    B, P, D = x.shape
    D_w, N = W.shape
    assert D == D_w
    M = B * P

    x2 = x.reshape(M, D)
    Wt = W.T                      # (N, D): D on lanes, tiny resident VMEM block
    b2 = b.reshape(N, 1)

    budget, limit_cap, min_steps = _vmem_budget()
    tm, total_bytes = _pick_row_tile(M, D, N, x2.dtype, Wt.dtype, b2.dtype,
                                     x.dtype, budget, min_steps)
    n_steps = pl.cdiv(M, tm)      # ragged last block handled by Pallas masking

    vmem_limit = int(min(max(int(1.25 * total_bytes), 32 * _MiB), limit_cap))

    # Extra pipelining depth only when tiles are small and the grid is long
    # enough to benefit (hides exposed DMA latency at few-hundred-KiB DMAs).
    if tm <= 256 and n_steps >= 3:
        try:
            x_spec = pl.BlockSpec((tm, D), lambda i: (i, 0),
                                  pipeline_mode=pl.Buffered(3))
        except TypeError:
            x_spec = pl.BlockSpec((tm, D), lambda i: (i, 0))
    else:
        x_spec = pl.BlockSpec((tm, D), lambda i: (i, 0))

    out_t = pl.pallas_call(
        cls_head_kernel,
        out_shape=jax.ShapeDtypeStruct((N, M), x.dtype),
        grid_spec=pl.GridSpec(
            grid=(n_steps,),
            in_specs=[
                x_spec,                                    # row tile of x
                pl.BlockSpec((N, D), lambda i: (0, 0)),    # resident Wt
                pl.BlockSpec((N, 1), lambda i: (0, 0)),    # bias column
            ],
            out_specs=pl.BlockSpec((N, tm), lambda i: (0, i)),  # lane-dense store
        ),
        compiler_params=pltpu.CompilerParams(
            dimension_semantics=("parallel",),
            vmem_limit_bytes=vmem_limit,
        ),
    )(x2, Wt, b2)

    # Transpose the tiny (N, M) result back and restore [batch, pos, num_labels].
    return out_t.T.reshape(B, P, N)


if __name__ == "__main__":
    # Small config consistent with the module's forward:
    #   d_model=32, num_labels=4, batch=2, pos=8
    batch, pos, d_model, num_labels = 2, 8, 32, 4
    dtype = jnp.float32

    key = jax.random.PRNGKey(0)
    kx, kw, kb = jax.random.split(key, 3)

    # Module declares W: [d_model, num_labels], b: [num_labels] (zeros by
    # default); give b non-zero values to exercise the bias path.
    x = jax.random.normal(kx, (batch, pos, d_model), dtype=dtype)
    W = jax.random.normal(kw, (d_model, num_labels), dtype=dtype) * 0.02
    b = jax.random.normal(kb, (num_labels,), dtype=dtype) * 0.1

    out = jax.block_until_ready(classification_head(x, W, b))
    ref = jnp.einsum("bpd,dn->bpn", x, W) + b
    assert out.shape == (batch, pos, num_labels)
    assert jnp.allclose(out, ref, atol=1e-5, rtol=1e-5)

    # Second check: multi-step grid with a ragged (masked) last block, no pad.
    batch2, pos2 = 2, 100            # M = 200 -> grid of 2 with partial tail
    x_big = jax.random.normal(kx, (batch2, pos2, d_model), dtype=dtype)
    out_big = jax.block_until_ready(classification_head(x_big, W, b))
    ref_big = jnp.einsum("bpd,dn->bpn", x_big, W) + b
    assert out_big.shape == (batch2, pos2, num_labels)
    assert jnp.allclose(out_big, ref_big, atol=1e-5, rtol=1e-5)

    print("KERNEL_OK")
</pallas_src>

<mosaic_0001>
module attributes {stable_mosaic.version = 11 : i64} {
  func.func @cls_head_kernel(%arg0: i32, %arg1: memref<128x32xf32, #tpu.memory_space<vmem>>, %arg2: memref<4x32xf32, #tpu.memory_space<vmem>>, %arg3: memref<4x1xf32, #tpu.memory_space<vmem>>, %arg4: memref<4x128xf32, #tpu.memory_space<vmem>>) attributes {dimension_semantics = [#tpu.dimension_semantics<parallel>], iteration_bounds = array<i64: 1>, scalar_prefetch = 0 : i64, scratch_operands = 0 : i64, tpu.core_type = #tpu.core_type<tc>, window_params = [{transform_indices = @transform_0, window_bounds = array<i64: 128, 32>}, {pipeline_mode = #tpu.pipeline_mode<synchronous>, transform_indices = @transform_1, window_bounds = array<i64: 4, 32>}, {pipeline_mode = #tpu.pipeline_mode<synchronous>, transform_indices = @transform_2, window_bounds = array<i64: 4, 1>}, {transform_indices = @transform_3, window_bounds = array<i64: 4, 128>}]} {
    %c0 = arith.constant 0 : index
    %c0_0 = arith.constant 0 : index
    %0 = vector.load %arg2[%c0, %c0_0] : memref<4x32xf32, #tpu.memory_space<vmem>>, vector<4x32xf32>
    %c0_1 = arith.constant 0 : index
    %c0_2 = arith.constant 0 : index
    %1 = vector.load %arg1[%c0_1, %c0_2] : memref<128x32xf32, #tpu.memory_space<vmem>>, vector<128x32xf32>
    %cst = arith.constant dense<0.000000e+00> : vector<4x128xf32>
    %2 = tpu.matmul %0, %1, %cst {dimension_numbers = #tpu.dot_dimension_numbers<[1], [1], [0], [0], [0, 0, 1, 0], [], []>} : vector<4x32xf32>, vector<128x32xf32>, vector<4x128xf32> -> vector<4x128xf32>
    %c0_3 = arith.constant 0 : index
    %c0_4 = arith.constant 0 : index
    %3 = vector.load %arg3[%c0_3, %c0_4] : memref<4x1xf32, #tpu.memory_space<vmem>>, vector<4x1xf32>
    %4 = vector.broadcast %3 : vector<4x1xf32> to vector<4x128xf32>
    %5 = arith.addf %2, %4 : vector<4x128xf32>
    %c0_5 = arith.constant 0 : index
    %c0_6 = arith.constant 0 : index
    %6 = vector.load %arg4[%c0_5, %c0_6] : memref<4x128xf32, #tpu.memory_space<vmem>>, vector<4x128xf32>
    tpu.vector_store %arg4[%c0_5, %c0_6], %5 {strides = array<i32>} : memref<4x128xf32, #tpu.memory_space<vmem>>, vector<4x128xf32>,
    return
  }
  func.func @transform_0(%arg0: i32) -> (i32, i32) {
    %c0_i32 = arith.constant 0 : i32
    %c0_i32_0 = arith.constant 0 : i32
    return %arg0, %c0_i32 : i32, i32
  }
  func.func @transform_1(%arg0: i32) -> (i32, i32) {
    %c0_i32 = arith.constant 0 : i32
    %c0_i32_0 = arith.constant 0 : i32
    %c0_i32_1 = arith.constant 0 : i32
    return %c0_i32, %c0_i32_0 : i32, i32
  }
  func.func @transform_2(%arg0: i32) -> (i32, i32) {
    %c0_i32 = arith.constant 0 : i32
    %c0_i32_0 = arith.constant 0 : i32
    %c0_i32_1 = arith.constant 0 : i32
    return %c0_i32, %c0_i32_0 : i32, i32
  }
  func.func @transform_3(%arg0: i32) -> (i32, i32) {
    %c0_i32 = arith.constant 0 : i32
    %c0_i32_0 = arith.constant 0 : i32
    return %c0_i32, %arg0 : i32, i32
  }
}

</mosaic_0001>

<llo_original>
// kernel: tpu_custom_call.1
$region0: #{tpu_custom_call.1}
  #allocation0 [shape = 'u32[]', space=smem, size = 0x4, offset = 0x4, fixed_abs, tag = 'smem constant byte address 0x4 - core index']
  #allocation1 [shape = 'u32[144,128]{1,0:T(1,128)}', space=vmem, size = 0x12000, scoped, tag = 'internal scratch']
  %s0 = inlined_call_operand.hbm [shape: f32[16,32], index: 0, kind: input, shape index: {}]
  %s1 = inlined_call_operand.vmem [shape: f32[4,32], index: 1, kind: input, shape index: {}]
  %s2 = inlined_call_operand.vmem [shape: f32[4,1], index: 2, kind: input, shape index: {}]
  %s3 = inlined_call_operand.hbm [shape: f32[4,16], index: 3, kind: output, shape index: {}]
  %s4 = sld [smem:[#allocation0]]
  $region26: #{tpu_custom_call.1} parent=0
    _
  %s6 = ssub.s32 1, %s4
  %s7 = scalar_select 0, %s6, %s4
  $region1: #{tpu_custom_call.1} parent=0
    #allocation2 [shape = 'u8[65536]{0}', space=vmem, size = 0x10000, scoped, tag = 'input window, operand 0, single buffered']
    #allocation3 [shape = 's32[1]{0}', space=sflag, size = 0x4, scoped, tag = 'scoped memory for tpu_custom_call.1']
    #allocation4 [shape = 's32[1]{0}', space=sflag, size = 0x4, scoped, tag = 'scoped memory for tpu_custom_call.1']
    #allocation5 [shape = 'u8[2048]{0}', space=vmem, size = 0x800, scoped, tag = 'output window, operand 0, single buffered']
    %8 = vsyncpa [#allocation3], 0
    %9 = vsyncpa [#allocation4], 0
    // Predicated region
    $region2: #{tpu_custom_call.1} parent=1 // pred_check
      _
    $region3: #{tpu_custom_call.1} parent=1 // pred_check_branch
      %11 = sbr.rel (0) target = $region5
    $region4: #{tpu_custom_call.1} parent=1 // pred_region
      %s13 = ssub.s32 2048, 256
      %14 = vsyncadd [#allocation3], %s13
      %s15 = sshll.u32 [#allocation2], 4
      %s16 = int_to_ptr.vmem [resolvable:$true] %s15
      %21 = dma.hbm_to_vmem [thread:$0]  %s0, 256, %s16, [#allocation3], 128, 128, 8
    $region5: #{tpu_custom_call.1} parent=1 // pred_fallthru
      _
    // Predicated region
    $region6: #{tpu_custom_call.1} parent=1 // pred_check
      _
    $region7: #{tpu_custom_call.1} parent=1 // pred_check_branch
      %23 = sbr.rel (0) target = $region9
    $region8: #{tpu_custom_call.1} parent=1 // pred_region
      _
    $region9: #{tpu_custom_call.1} parent=1 // pred_fallthru
      _
    // Predicated region
    $region10: #{tpu_custom_call.1} parent=1 // pred_check
      _
    $region11: #{tpu_custom_call.1} parent=1 // pred_check_branch
      %25 = sbr.rel (0) target = $region13
    $region12: #{tpu_custom_call.1} parent=1 // pred_region
      _
    $region13: #{tpu_custom_call.1} parent=1 // pred_fallthru
      _
    // Predicated region
    $region14: #{tpu_custom_call.1} parent=1 // pred_check
      _
    $region15: #{tpu_custom_call.1} parent=1 // pred_check_branch
      %27 = sbr.rel (0) target = $region17
    $region16: #{tpu_custom_call.1} parent=1 // pred_region
      %28 = dma.done [#allocation3], 2048
    $region17: #{tpu_custom_call.1} parent=1 // pred_fallthru
      _
    %v29 = vld [vmem:[%s1] sm:$0xf]
    %v30 = vld [vmem:[#allocation2] sm:$0xff]
    %v31 = vld [vmem:[#allocation2 + $0x8] sm:$0xff]
    %v32 = vld [vmem:[#allocation2 + $0x10] sm:$0xff]
    %v33 = vld [vmem:[#allocation2 + $0x18] sm:$0xff]
    %v34 = vld [vmem:[#allocation2 + $0x20] sm:$0xff]
    %v35 = vld [vmem:[#allocation2 + $0x28] sm:$0xff]
    %v36 = vld [vmem:[#allocation2 + $0x30] sm:$0xff]
    %v37 = vld [vmem:[#allocation2 + $0x38] sm:$0xff]
    %v38 = vld [vmem:[#allocation2 + $0x40] sm:$0xff]
    %v39 = vld [vmem:[#allocation2 + $0x48] sm:$0xff]
    %v40 = vld [vmem:[#allocation2 + $0x50] sm:$0xff]
    %v41 = vld [vmem:[#allocation2 + $0x58] sm:$0xff]
    %v42 = vld [vmem:[#allocation2 + $0x60] sm:$0xff]
    %v43 = vld [vmem:[#allocation2 + $0x68] sm:$0xff]
    %v44 = vld [vmem:[#allocation2 + $0x70] sm:$0xff]
    %v45 = vld [vmem:[#allocation2 + $0x78] sm:$0xff]
    %v46 = vld [vmem:[%s2] sm:$0xf]
    %48 = vset.pattern.permute.xlu0 0
    %49 = vperm.xlu0 %48, %v46
    %v50 = vpop.permute.xlu0 %49
    %vm52 = vcmask 261120
    %v54 = vsel %vm52, %v29, 0
    %v57 = vsel %vm52, %v30, 0
    %v60 = vsel %vm52, %v31, 0
    %v63 = vsel %vm52, %v32, 0
    %v66 = vsel %vm52, %v33, 0
    %v69 = vsel %vm52, %v34, 0
    %v72 = vsel %vm52, %v35, 0
    %v75 = vsel %vm52, %v36, 0
    %v78 = vsel %vm52, %v37, 0
    %v81 = vsel %vm52, %v38, 0
    %v84 = vsel %vm52, %v39, 0
    %v87 = vsel %vm52, %v40, 0
    %v90 = vsel %vm52, %v41, 0
    %v93 = vsel %vm52, %v42, 0
    %v96 = vsel %vm52, %v43, 0
    %v99 = vsel %vm52, %v44, 0
    %v102 = vsel %vm52, %v45, 0
    %104 = vmatprep.subr.mxu0 0.0
    %105 = vmatpush1.xpose.msra.mxu0 %v102
    %106 = vmatprep.subr.mxu0 0.0
    %107 = vmatpush1.xpose.msra.mxu0 %v99
    %108 = vmatprep.subr.mxu0 0.0
    %109 = vmatpush1.xpose.msra.mxu0 %v96
    %110 = vmatprep.subr.mxu0 0.0
    %111 = vmatpush1.xpose.msra.mxu0 %v93
    %112 = vmatprep.subr.mxu0 0.0
    %113 = vmatpush1.xpose.msra.mxu0 %v90
    %114 = vmatprep.subr.mxu0 0.0
    %115 = vmatpush1.xpose.msra.mxu0 %v87
    %116 = vmatprep.subr.mxu0 0.0
    %117 = vmatpush1.xpose.msra.mxu0 %v84
    %118 = vmatprep.subr.mxu0 0.0
    %119 = vmatpush1.xpose.msra.mxu0 %v81
    %120 = vmatprep.subr.mxu0 0.0
    %121 = vmatpush1.xpose.msra.mxu0 %v78
    %122 = vmatprep.subr.mxu0 0.0
    %123 = vmatpush1.xpose.msra.mxu0 %v75
    %124 = vmatprep.subr.mxu0 0.0
    %125 = vmatpush1.xpose.msra.mxu0 %v72
    %126 = vmatprep.subr.mxu0 0.0
    %127 = vmatpush1.xpose.msra.mxu0 %v69
    %128 = vmatprep.subr.mxu0 0.0
    %129 = vmatpush1.xpose.msra.mxu0 %v66
    %130 = vmatprep.subr.mxu0 0.0
    %131 = vmatpush1.xpose.msra.mxu0 %v63
    %132 = vmatprep.subr.mxu0 0.0
    %133 = vmatpush1.xpose.msra.mxu0 %v60
    %134 = vmatprep.subr.mxu0 0.0
    %135 = vmatpush1.xpose.msra.mxu0 %v57
    %136 = vmatprep.subr.mxu0 0.0
    %137 = vmatpush2.xpose.msra.mxu0 0.0
    %138 = vmatprep.subr.mxu0 0.0
    %139 = vmatpush2.xpose.msra.mxu0 0.0
    %140 = vmatprep.subr.mxu0 0.0
    %141 = vmatpush2.xpose.msra.mxu0 0.0
    %142 = vmatprep.subr.mxu0 0.0
    %143 = vmatpush2.xpose.msra.mxu0 0.0
    %144 = vmatprep.subr.mxu0 0.0
    %145 = vmatpush2.xpose.msra.mxu0 0.0
    %146 = vmatprep.subr.mxu0 0.0
    %147 = vmatpush2.xpose.msra.mxu0 0.0
    %148 = vmatprep.subr.mxu0 0.0
    %149 = vmatpush2.xpose.msra.mxu0 0.0
    %150 = vmatprep.subr.mxu0 0.0
    %151 = vmatpush2.xpose.msra.mxu0 0.0
    %152 = vmatprep.subr.mxu0 0.0
    %153 = vmatpush2.xpose.msra.mxu0 0.0
    %154 = vmatprep.subr.mxu0 0.0
    %155 = vmatpush2.xpose.msra.mxu0 0.0
    %156 = vmatprep.subr.mxu0 0.0
    %157 = vmatpush2.xpose.msra.mxu0 0.0
    %158 = vmatprep.subr.mxu0 0.0
    %159 = vmatpush2.xpose.msra.mxu0 0.0
    %160 = vmatprep.subr.mxu0 0.0
    %161 = vmatpush2.xpose.msra.mxu0 0.0
    %162 = vmatprep.subr.mxu0 0.0
    %163 = vmatpush2.xpose.msra.mxu0 0.0
    %164 = vmatprep.subr.mxu0 0.0
    %165 = vmatpush2.xpose.msra.mxu0 0.0
    %166 = vmatprep.subr.mxu0 0.0
    %167 = vmatpush2.xpose.msra.mxu0 0.0
    %168 = vmatprep.mubr.f32.mxu0 0.0
    %169 = vmatmul.mubr.f32.gmra.mxu0 %v54
    %v170 = vpop.f32.mrf.mxu0
    %v171 = vadd.f32 %v50, %v170
    %v172 = vpop.f32.mrf.mxu0
    %173 = vdwg.mxu0
    %174 = vst [vmem:[#allocation5] sm:$0xf] %v171
    // Predicated region
    $region18: #{tpu_custom_call.1} parent=1 // pred_check
      _
    $region19: #{tpu_custom_call.1} parent=1 // pred_check_branch
      %176 = sbr.rel (0) target = $region21
    $region20: #{tpu_custom_call.1} parent=1 // pred_region
      %s178 = ssub.s32 64, 64
      %179 = vsyncadd [#allocation4], %s178
      %s181 = sshll.u32 [#allocation5], 4
      %s182 = int_to_ptr.vmem [resolvable:$true] %s181
      %184 = dma.vmem_to_hbm [thread:$0]  %s182, 64, %s3, [#allocation4]
    $region21: #{tpu_custom_call.1} parent=1 // pred_fallthru
      _
    // Predicated region
    $region22: #{tpu_custom_call.1} parent=1 // pred_check
      _
    $region23: #{tpu_custom_call.1} parent=1 // pred_check_branch
      %186 = sbr.rel (0) target = $region25
    $region24: #{tpu_custom_call.1} parent=1 // pred_region
      %187 = dma.done [#allocation4], 64
    $region25: #{tpu_custom_call.1} parent=1 // pred_fallthru
      _
    %188 = vsyncpa [#allocation3], 1
    %189 = vsyncpa [#allocation4], 1

</llo_original>
